<compile_context>
chip_gen: v7x
topology: tpu7x:2x2x1
jax: 0.10.0
libtpu: 0.0.40
codegen_flags: <defaults>
</compile_context>

<pallas_src>
import functools

import jax
import jax.numpy as jnp
from jax import lax
from jax.experimental import pallas as pl
from jax.experimental.pallas import tpu as pltpu


def _round_up(x, m):
    return ((x + m - 1) // m) * m


def _make_vec_conv1d_kernel(ksize, pad, length, lout, seq_stride, bm_block):
    """Fused conv kernel for one block of `bm_block` folded (batch*3) sequences."""
    mtot = bm_block * seq_stride                 # folded M dimension

    def kernel(x_ref, w_ref, o_ref, xp_ref):
        # x_ref : (bm_block, L, C)       folded sequences, channels-last
        # w_ref : (K, Cin, Cout)         conv taps (torch weight transposed)
        # o_ref : (bm_block, Lout, Cout)
        # xp_ref: (mtot + K - 1, Cin)    VMEM scratch: zero-padded, stride-S packed
        cout = w_ref.shape[-1]

        # ---- pack sequences into the flat scratch with per-sequence halo -----
        # Zero every step: scratch persists across grid steps and the halo rows
        # are never overwritten by the packing stores below.
        xp_ref[...] = jnp.zeros_like(xp_ref)
        for j in range(bm_block):                                  # static unroll
            base = j * seq_stride + pad
            xp_ref[base:base + length, :] = x_ref[j].astype(jnp.float32)

        # ---- K shifted matmuls over the whole folded M dimension -------------
        acc = jnp.zeros((mtot, cout), jnp.float32)
        for k in range(ksize):                                     # static unroll
            acc = acc + jnp.dot(xp_ref[k:k + mtot, :], w_ref[k],
                                preferred_element_type=jnp.float32)

        # ---- scatter the valid rows back to (bm_block, Lout, Cout) ------------
        for j in range(bm_block):                                  # static unroll
            base = j * seq_stride
            o_ref[j] = acc[base:base + lout, :].astype(o_ref.dtype)

    return kernel


def _default_bm_block(bm):
    """Single fused launch for small batches, otherwise a modest parallel block."""
    if bm <= 12:
        return bm
    for cand in (12, 8, 6, 4, 3, 2):
        if bm % cand == 0:
            return cand
    return 1


def vec_conv1d(x, weight, *, edges_to_nodes=False, bm_block=None):
    """
    Pallas TPU equivalent of VecConv1d.forward.

    x:      (B, L, C, 3)
    weight: (C, C, K)  -- torch nn.Conv1d weight layout (out_chan, in_chan, K), no bias
    returns (B, Lout, C, 3); Lout = L (odd K) or L + 1 (even K, edges->nodes)
    """
    b, length, chan, three = x.shape
    assert three == 3
    cout, cin, ksize = weight.shape
    assert cin == chan and cout == chan
    if edges_to_nodes:
        assert ksize % 2 == 0
    else:
        assert ksize % 2 == 1
    pad = ksize // 2
    lout = length + 2 * pad - ksize + 1

    bm = 3 * b
    if bm_block is None:
        bm_block = _default_bm_block(bm)
    assert bm % bm_block == 0
    grid = (bm // bm_block,)

    # Layout plumbing in the wrapper: fold the 3-axis into the leading (M) axis,
    # keep channels on the minor (lane) axis.  No padding here (done in VMEM).
    xt = jnp.transpose(x, (0, 3, 1, 2)).reshape(bm, length, chan)    # (3B, L, C)
    w_kio = jnp.transpose(weight, (2, 1, 0)).astype(jnp.float32)     # (K, Cin, Cout)

    seq_stride = _round_up(length + 2 * pad, 8)   # sublane-aligned per-sequence slot

    out = pl.pallas_call(
        _make_vec_conv1d_kernel(ksize, pad, length, lout, seq_stride, bm_block),
        out_shape=jax.ShapeDtypeStruct((bm, lout, chan), x.dtype),
        grid=grid,
        in_specs=[
            pl.BlockSpec((bm_block, length, chan), lambda i: (i, 0, 0)),
            pl.BlockSpec((ksize, chan, chan), lambda i: (0, 0, 0)),
        ],
        out_specs=pl.BlockSpec((bm_block, lout, chan), lambda i: (i, 0, 0)),
        scratch_shapes=[
            pltpu.VMEM((bm_block * seq_stride + ksize - 1, chan), jnp.float32),
        ],
        compiler_params=pltpu.CompilerParams(
            dimension_semantics=("parallel",)),
    )(xt, w_kio)

    return jnp.transpose(out.reshape(b, 3, lout, chan), (0, 2, 3, 1))


def vec_conv1d_reference(x, weight, *, edges_to_nodes=False):
    """Pure-JAX reference with the exact torch Conv1d (cross-correlation) math."""
    del edges_to_nodes
    b, length, chan, _ = x.shape
    ksize = weight.shape[2]
    pad = ksize // 2
    lout = length + 2 * pad - ksize + 1
    xt = jnp.transpose(x, (0, 3, 1, 2)).reshape(3 * b, length, chan)
    xp = jnp.pad(xt, ((0, 0), (pad, pad), (0, 0)))
    w_kio = jnp.transpose(weight, (2, 1, 0))
    y = sum(jnp.einsum('blc,co->blo', xp[:, k:k + lout, :], w_kio[k],
                       precision=lax.Precision.HIGHEST)
            for k in range(ksize))
    return jnp.transpose(y.reshape(b, 3, lout, chan), (0, 2, 3, 1))


if __name__ == "__main__":
    B, N, C = 2, 16, 32
    key = jax.random.PRNGKey(0)
    kx, kw1, kw2 = jax.random.split(key, 3)

    # case 1: odd kernel, 'same' padding (node features); split the folded 3*B
    #         axis across a parallel grid (exercises multi-step / v7x 2-TC path).
    K1 = 7
    x_nodes = jax.random.normal(kx, (B, N, C, 3), jnp.float32)
    w1 = jax.random.normal(kw1, (C, C, K1), jnp.float32) / jnp.sqrt(float(C * K1))

    conv_same = jax.jit(functools.partial(vec_conv1d, edges_to_nodes=False, bm_block=3))
    y1 = jax.block_until_ready(conv_same(x_nodes, w1))
    assert y1.shape == (B, N, C, 3)
    ref1 = vec_conv1d_reference(x_nodes, w1, edges_to_nodes=False)
    assert bool(jnp.all(jnp.isfinite(y1)))
    err1 = float(jnp.max(jnp.abs(y1 - ref1)))
    assert err1 < 2e-2, err1

    # case 2: even kernel, edges -> nodes (Lout = L + 1); single fused launch.
    K2 = 4
    x_edges = x_nodes[:, : N - 1]                       # (B, N-1, C, 3) edge features
    w2 = jax.random.normal(kw2, (C, C, K2), jnp.float32) / jnp.sqrt(float(C * K2))

    conv_e2n = jax.jit(functools.partial(vec_conv1d, edges_to_nodes=True))
    y2 = jax.block_until_ready(conv_e2n(x_edges, w2))
    assert y2.shape == (B, N, C, 3)
    ref2 = vec_conv1d_reference(x_edges, w2, edges_to_nodes=True)
    assert bool(jnp.all(jnp.isfinite(y2)))
    err2 = float(jnp.max(jnp.abs(y2 - ref2)))
    assert err2 < 2e-2, err2

    print("KERNEL_OK")
</pallas_src>

<mosaic_0001>
module attributes {stable_mosaic.version = 11 : i64} {
  func.func @kernel(%arg0: i32, %arg1: memref<3x16x32xf32, #tpu.memory_space<vmem>>, %arg2: memref<7x32x32xf32, #tpu.memory_space<vmem>>, %arg3: memref<3x16x32xf32, #tpu.memory_space<vmem>>, %arg4: memref<78x32xf32, #tpu.memory_space<vmem>>) attributes {dimension_semantics = [#tpu.dimension_semantics<parallel>], iteration_bounds = array<i64: 2>, scalar_prefetch = 0 : i64, scratch_operands = 1 : i64, tpu.core_type = #tpu.core_type<tc>, window_params = [{transform_indices = @transform_0, window_bounds = array<i64: 3, 16, 32>}, {pipeline_mode = #tpu.pipeline_mode<synchronous>, transform_indices = @transform_1, window_bounds = array<i64: 7, 32, 32>}, {transform_indices = @transform_2, window_bounds = array<i64: 3, 16, 32>}]} {
    %cst = arith.constant 0.000000e+00 : f32
    %0 = vector.broadcast %cst : f32 to vector<78x32xf32>
    %c0 = arith.constant 0 : index
    %c0_0 = arith.constant 0 : index
    %1 = vector.load %arg4[%c0, %c0_0] : memref<78x32xf32, #tpu.memory_space<vmem>>, vector<78x32xf32>
    tpu.vector_store %arg4[%c0, %c0_0], %0 {strides = array<i32>} : memref<78x32xf32, #tpu.memory_space<vmem>>, vector<78x32xf32>,
    %c0_1 = arith.constant 0 : index
    %c0_2 = arith.constant 0 : index
    %c0_3 = arith.constant 0 : index
    %2 = vector.load %arg1[%c0_1, %c0_2, %c0_3] : memref<3x16x32xf32, #tpu.memory_space<vmem>>, vector<1x16x32xf32>
    %3 = vector.shape_cast %2 : vector<1x16x32xf32> to vector<16x32xf32>
    %c3 = arith.constant 3 : index
    %c0_4 = arith.constant 0 : index
    %4 = vector.load %arg4[%c3, %c0_4] : memref<78x32xf32, #tpu.memory_space<vmem>>, vector<16x32xf32>
    tpu.vector_store %arg4[%c3, %c0_4], %3 {strides = array<i32>} : memref<78x32xf32, #tpu.memory_space<vmem>>, vector<16x32xf32>,
    %c1 = arith.constant 1 : index
    %c0_5 = arith.constant 0 : index
    %c0_6 = arith.constant 0 : index
    %5 = vector.load %arg1[%c1, %c0_5, %c0_6] : memref<3x16x32xf32, #tpu.memory_space<vmem>>, vector<1x16x32xf32>
    %6 = vector.shape_cast %5 : vector<1x16x32xf32> to vector<16x32xf32>
    %c27 = arith.constant 27 : index
    %c0_7 = arith.constant 0 : index
    %7 = vector.load %arg4[%c27, %c0_7] : memref<78x32xf32, #tpu.memory_space<vmem>>, vector<16x32xf32>
    tpu.vector_store %arg4[%c27, %c0_7], %6 {strides = array<i32>} : memref<78x32xf32, #tpu.memory_space<vmem>>, vector<16x32xf32>,
    %c2 = arith.constant 2 : index
    %c0_8 = arith.constant 0 : index
    %c0_9 = arith.constant 0 : index
    %8 = vector.load %arg1[%c2, %c0_8, %c0_9] : memref<3x16x32xf32, #tpu.memory_space<vmem>>, vector<1x16x32xf32>
    %9 = vector.shape_cast %8 : vector<1x16x32xf32> to vector<16x32xf32>
    %c51 = arith.constant 51 : index
    %c0_10 = arith.constant 0 : index
    %10 = vector.load %arg4[%c51, %c0_10] : memref<78x32xf32, #tpu.memory_space<vmem>>, vector<16x32xf32>
    tpu.vector_store %arg4[%c51, %c0_10], %9 {strides = array<i32>} : memref<78x32xf32, #tpu.memory_space<vmem>>, vector<16x32xf32>,
    %cst_11 = arith.constant 0.000000e+00 : f32
    %11 = vector.broadcast %cst_11 : f32 to vector<72x32xf32>
    %c0_12 = arith.constant 0 : index
    %c0_13 = arith.constant 0 : index
    %12 = vector.load %arg4[%c0_12, %c0_13] : memref<78x32xf32, #tpu.memory_space<vmem>>, vector<72x32xf32>
    %c0_14 = arith.constant 0 : index
    %c0_15 = arith.constant 0 : index
    %c0_16 = arith.constant 0 : index
    %13 = vector.load %arg2[%c0_14, %c0_15, %c0_16] : memref<7x32x32xf32, #tpu.memory_space<vmem>>, vector<1x32x32xf32>
    %14 = vector.shape_cast %13 : vector<1x32x32xf32> to vector<32x32xf32>
    %cst_17 = arith.constant dense<0.000000e+00> : vector<72x32xf32>
    %15 = tpu.matmul %12, %14, %cst_17 {dimension_numbers = #tpu.dot_dimension_numbers<[1], [0], [0], [1], [0, 0, 1, 1], [], []>} : vector<72x32xf32>, vector<32x32xf32>, vector<72x32xf32> -> vector<72x32xf32>
    %16 = arith.addf %11, %15 : vector<72x32xf32>
    %c1_18 = arith.constant 1 : index
    %c0_19 = arith.constant 0 : index
    %17 = vector.load %arg4[%c1_18, %c0_19] : memref<78x32xf32, #tpu.memory_space<vmem>>, vector<72x32xf32>
    %c1_20 = arith.constant 1 : index
    %c0_21 = arith.constant 0 : index
    %c0_22 = arith.constant 0 : index
    %18 = vector.load %arg2[%c1_20, %c0_21, %c0_22] : memref<7x32x32xf32, #tpu.memory_space<vmem>>, vector<1x32x32xf32>
    %19 = vector.shape_cast %18 : vector<1x32x32xf32> to vector<32x32xf32>
    %cst_23 = arith.constant dense<0.000000e+00> : vector<72x32xf32>
    %20 = tpu.matmul %17, %19, %cst_23 {dimension_numbers = #tpu.dot_dimension_numbers<[1], [0], [0], [1], [0, 0, 1, 1], [], []>} : vector<72x32xf32>, vector<32x32xf32>, vector<72x32xf32> -> vector<72x32xf32>
    %21 = arith.addf %16, %20 : vector<72x32xf32>
    %c2_24 = arith.constant 2 : index
    %c0_25 = arith.constant 0 : index
    %22 = vector.load %arg4[%c2_24, %c0_25] : memref<78x32xf32, #tpu.memory_space<vmem>>, vector<72x32xf32>
    %c2_26 = arith.constant 2 : index
    %c0_27 = arith.constant 0 : index
    %c0_28 = arith.constant 0 : index
    %23 = vector.load %arg2[%c2_26, %c0_27, %c0_28] : memref<7x32x32xf32, #tpu.memory_space<vmem>>, vector<1x32x32xf32>
    %24 = vector.shape_cast %23 : vector<1x32x32xf32> to vector<32x32xf32>
    %cst_29 = arith.constant dense<0.000000e+00> : vector<72x32xf32>
    %25 = tpu.matmul %22, %24, %cst_29 {dimension_numbers = #tpu.dot_dimension_numbers<[1], [0], [0], [1], [0, 0, 1, 1], [], []>} : vector<72x32xf32>, vector<32x32xf32>, vector<72x32xf32> -> vector<72x32xf32>
    %26 = arith.addf %21, %25 : vector<72x32xf32>
    %c3_30 = arith.constant 3 : index
    %c0_31 = arith.constant 0 : index
    %27 = vector.load %arg4[%c3_30, %c0_31] : memref<78x32xf32, #tpu.memory_space<vmem>>, vector<72x32xf32>
    %c3_32 = arith.constant 3 : index
    %c0_33 = arith.constant 0 : index
    %c0_34 = arith.constant 0 : index
    %28 = vector.load %arg2[%c3_32, %c0_33, %c0_34] : memref<7x32x32xf32, #tpu.memory_space<vmem>>, vector<1x32x32xf32>
    %29 = vector.shape_cast %28 : vector<1x32x32xf32> to vector<32x32xf32>
    %cst_35 = arith.constant dense<0.000000e+00> : vector<72x32xf32>
    %30 = tpu.matmul %27, %29, %cst_35 {dimension_numbers = #tpu.dot_dimension_numbers<[1], [0], [0], [1], [0, 0, 1, 1], [], []>} : vector<72x32xf32>, vector<32x32xf32>, vector<72x32xf32> -> vector<72x32xf32>
    %31 = arith.addf %26, %30 : vector<72x32xf32>
    %c4 = arith.constant 4 : index
    %c0_36 = arith.constant 0 : index
    %32 = vector.load %arg4[%c4, %c0_36] : memref<78x32xf32, #tpu.memory_space<vmem>>, vector<72x32xf32>
    %c4_37 = arith.constant 4 : index
    %c0_38 = arith.constant 0 : index
    %c0_39 = arith.constant 0 : index
    %33 = vector.load %arg2[%c4_37, %c0_38, %c0_39] : memref<7x32x32xf32, #tpu.memory_space<vmem>>, vector<1x32x32xf32>
    %34 = vector.shape_cast %33 : vector<1x32x32xf32> to vector<32x32xf32>
    %cst_40 = arith.constant dense<0.000000e+00> : vector<72x32xf32>
    %35 = tpu.matmul %32, %34, %cst_40 {dimension_numbers = #tpu.dot_dimension_numbers<[1], [0], [0], [1], [0, 0, 1, 1], [], []>} : vector<72x32xf32>, vector<32x32xf32>, vector<72x32xf32> -> vector<72x32xf32>
    %36 = arith.addf %31, %35 : vector<72x32xf32>
    %c5 = arith.constant 5 : index
    %c0_41 = arith.constant 0 : index
    %37 = vector.load %arg4[%c5, %c0_41] : memref<78x32xf32, #tpu.memory_space<vmem>>, vector<72x32xf32>
    %c5_42 = arith.constant 5 : index
    %c0_43 = arith.constant 0 : index
    %c0_44 = arith.constant 0 : index
    %38 = vector.load %arg2[%c5_42, %c0_43, %c0_44] : memref<7x32x32xf32, #tpu.memory_space<vmem>>, vector<1x32x32xf32>
    %39 = vector.shape_cast %38 : vector<1x32x32xf32> to vector<32x32xf32>
    %cst_45 = arith.constant dense<0.000000e+00> : vector<72x32xf32>
    %40 = tpu.matmul %37, %39, %cst_45 {dimension_numbers = #tpu.dot_dimension_numbers<[1], [0], [0], [1], [0, 0, 1, 1], [], []>} : vector<72x32xf32>, vector<32x32xf32>, vector<72x32xf32> -> vector<72x32xf32>
    %41 = arith.addf %36, %40 : vector<72x32xf32>
    %c6 = arith.constant 6 : index
    %c0_46 = arith.constant 0 : index
    %42 = vector.load %arg4[%c6, %c0_46] : memref<78x32xf32, #tpu.memory_space<vmem>>, vector<72x32xf32>
    %c6_47 = arith.constant 6 : index
    %c0_48 = arith.constant 0 : index
    %c0_49 = arith.constant 0 : index
    %43 = vector.load %arg2[%c6_47, %c0_48, %c0_49] : memref<7x32x32xf32, #tpu.memory_space<vmem>>, vector<1x32x32xf32>
    %44 = vector.shape_cast %43 : vector<1x32x32xf32> to vector<32x32xf32>
    %cst_50 = arith.constant dense<0.000000e+00> : vector<72x32xf32>
    %45 = tpu.matmul %42, %44, %cst_50 {dimension_numbers = #tpu.dot_dimension_numbers<[1], [0], [0], [1], [0, 0, 1, 1], [], []>} : vector<72x32xf32>, vector<32x32xf32>, vector<72x32xf32> -> vector<72x32xf32>
    %46 = arith.addf %41, %45 : vector<72x32xf32>
    %47 = vector.extract_strided_slice %46 {offsets = [0, 0], sizes = [16, 32], strides = [1, 1]} : vector<72x32xf32> to vector<16x32xf32>
    %c0_51 = arith.constant 0 : index
    %c0_52 = arith.constant 0 : index
    %c0_53 = arith.constant 0 : index
    %48 = vector.load %arg3[%c0_51, %c0_52, %c0_53] : memref<3x16x32xf32, #tpu.memory_space<vmem>>, vector<1x16x32xf32>
    %49 = vector.shape_cast %48 : vector<1x16x32xf32> to vector<16x32xf32>
    %50 = vector.shape_cast %47 : vector<16x32xf32> to vector<1x16x32xf32>
    tpu.vector_store %arg3[%c0_51, %c0_52, %c0_53], %50 {strides = array<i32>} : memref<3x16x32xf32, #tpu.memory_space<vmem>>, vector<1x16x32xf32>,
    %51 = vector.extract_strided_slice %46 {offsets = [24, 0], sizes = [16, 32], strides = [1, 1]} : vector<72x32xf32> to vector<16x32xf32>
    %c1_54 = arith.constant 1 : index
    %c0_55 = arith.constant 0 : index
    %c0_56 = arith.constant 0 : index
    %52 = vector.load %arg3[%c1_54, %c0_55, %c0_56] : memref<3x16x32xf32, #tpu.memory_space<vmem>>, vector<1x16x32xf32>
    %53 = vector.shape_cast %52 : vector<1x16x32xf32> to vector<16x32xf32>
    %54 = vector.shape_cast %51 : vector<16x32xf32> to vector<1x16x32xf32>
    tpu.vector_store %arg3[%c1_54, %c0_55, %c0_56], %54 {strides = array<i32>} : memref<3x16x32xf32, #tpu.memory_space<vmem>>, vector<1x16x32xf32>,
    %55 = vector.extract_strided_slice %46 {offsets = [48, 0], sizes = [16, 32], strides = [1, 1]} : vector<72x32xf32> to vector<16x32xf32>
    %c2_57 = arith.constant 2 : index
    %c0_58 = arith.constant 0 : index
    %c0_59 = arith.constant 0 : index
    %56 = vector.load %arg3[%c2_57, %c0_58, %c0_59] : memref<3x16x32xf32, #tpu.memory_space<vmem>>, vector<1x16x32xf32>
    %57 = vector.shape_cast %56 : vector<1x16x32xf32> to vector<16x32xf32>
    %58 = vector.shape_cast %55 : vector<16x32xf32> to vector<1x16x32xf32>
    tpu.vector_store %arg3[%c2_57, %c0_58, %c0_59], %58 {strides = array<i32>} : memref<3x16x32xf32, #tpu.memory_space<vmem>>, vector<1x16x32xf32>,
    return
  }
  func.func @transform_0(%arg0: i32) -> (i32, i32, i32) {
    %c0_i32 = arith.constant 0 : i32
    %c0_i32_0 = arith.constant 0 : i32
    %c0_i32_1 = arith.constant 0 : i32
    return %arg0, %c0_i32, %c0_i32_0 : i32, i32, i32
  }
  func.func @transform_1(%arg0: i32) -> (i32, i32, i32) {
    %c0_i32 = arith.constant 0 : i32
    %c0_i32_0 = arith.constant 0 : i32
    %c0_i32_1 = arith.constant 0 : i32
    %c0_i32_2 = arith.constant 0 : i32
    return %c0_i32, %c0_i32_0, %c0_i32_1 : i32, i32, i32
  }
  func.func @transform_2(%arg0: i32) -> (i32, i32, i32) {
    %c0_i32 = arith.constant 0 : i32
    %c0_i32_0 = arith.constant 0 : i32
    %c0_i32_1 = arith.constant 0 : i32
    return %arg0, %c0_i32, %c0_i32_0 : i32, i32, i32
  }
}

</mosaic_0001>

<llo_original>
// kernel: vec_conv1d.1
$region0: #{vec_conv1d.1}
  #allocation0 [shape = 'u32[]', space=smem, size = 0x4, offset = 0x4, fixed_abs, tag = 'smem constant byte address 0x4 - core index']
  #allocation1 [shape = 'u32[144,128]{1,0:T(1,128)}', space=vmem, size = 0x12000, scoped, tag = 'internal scratch']
  #allocation2 [shape = 'f32[78,32]{1,0:T(8,128)}', space=vmem, size = 0xa000, scoped, tag = 'scratch operand']
  %s0 = inlined_call_operand.vmem [shape: f32[6,16,32], index: 0, kind: input, shape index: {}]
  %s1 = inlined_call_operand.vmem [shape: f32[7,32,32], index: 1, kind: input, shape index: {}]
  %s2 = inlined_call_operand.hbm [shape: f32[6,16,32], index: 2, kind: output, shape index: {}]
  %s3 = sld [smem:[#allocation0]]
  $region41: #{vec_conv1d.1} parent=0
    _
  %s5 = ssub.s32 1, %s3
  %s6 = scalar_select 0, %s5, %s3
  $region1: #{vec_conv1d.1} parent=0
    #allocation3 [shape = 'u8[49152]{0}', space=vmem, size = 0xc000, scoped, tag = 'output window, operand 0']
    #allocation4 [shape = 's32[2]{0}', space=sflag, size = 0x8, scoped, tag = 'scoped memory for vec_conv1d.1']
    %7 = vsyncpa [#allocation4], 0
    %s8 = scalar_lea.sflag [#allocation4], 1
    %9 = vsyncpa %s8, 0
    loop: start=0, step=1, limit=4
    $region2: #{vec_conv1d.1} parent=1 // loop_pre_header
      _
    $region3: #{vec_conv1d.1} parent=1 // loop_header
      %s11 = sphi 0, %s15
      %p12 = scmp.ge.s32.totalorder %s11, 4
      %s21 = sphi 0, %s23
      %s24 = sphi 0, %s21
      %s25 = sphi 0, %s24
      %s41 = sphi 0, %s25
      %s45 = sphi 0, %s45
      %s47 = sphi 0, %s45
      %s48 = sphi 0, %s47
      %s62 = sphi 0, %s48
      %s68 = sphi 0, %s70
      %s71 = sphi 0, %s68
      %s72 = sphi 0, %s71
      %s88 = sphi 0, %s72
    $region4: #{vec_conv1d.1} parent=1 // loop_header_branch
      %14 = sbr.rel (%p12) target = $region8
    $region5: #{vec_conv1d.1} parent=1 // loop_body
      %s16 = ssub.s32 %s11, 1
      %s17 = ssub.s32 %s11, 2
      %s18 = sadd.s32 %s11, 1
      %s19 = ssub.s32 %s11, %s18
      %p20 = scmp.eq.s32.totalorder %s19, 0
      %s22 = sadd.s32 %s21, 1
      %s23 = scalar_select %p20, %s21, %s22
      %p26 = pneg %p20
      %p27 = scmp.eq.s32.totalorder %s11, 1
      %p28 = por %p26, %p27
      %p29 = scmp.ne.s32.totalorder %s21, %s24
      %p30 = scmp.eq.s32.totalorder %s11, 0
      %p31 = por %p29, %p30
      %p32 = scmp.ne.s32.totalorder %s21, %s24
      %p33 = scmp.eq.s32.totalorder %s16, 1
      %p34 = por %p32, %p33
      %p35 = scmp.ne.s32.totalorder %s24, %s25
      %p36 = scmp.eq.s32.totalorder %s16, 0
      %p37 = por %p35, %p36
      %p38 = scmp.ne.s32.totalorder %s24, %s25
      %p39 = scmp.eq.s32.totalorder %s17, 1
      %p40 = por %p38, %p39
      %p42 = scmp.ne.s32.totalorder %s25, %s41
      %p43 = scmp.eq.s32.totalorder %s17, 0
      %p44 = por %p42, %p43
      %s46 = sadd.s32 %s45, 1
      %p49 = scmp.eq.s32.totalorder %s11, 1
      %p50 = scmp.ne.s32.totalorder %s45, %s47
      %p51 = scmp.eq.s32.totalorder %s11, 0
      %p52 = por %p50, %p51
      %p53 = scmp.ne.s32.totalorder %s45, %s47
      %p54 = scmp.eq.s32.totalorder %s16, 1
      %p55 = por %p53, %p54
      %p56 = scmp.ne.s32.totalorder %s47, %s48
      %p57 = scmp.eq.s32.totalorder %s16, 0
      %p58 = por %p56, %p57
      %p59 = scmp.ne.s32.totalorder %s47, %s48
      %p60 = scmp.eq.s32.totalorder %s17, 1
      %p61 = por %p59, %p60
      %p63 = scmp.ne.s32.totalorder %s48, %s62
      %p64 = scmp.eq.s32.totalorder %s17, 0
      %p65 = por %p63, %p64
      %s66 = ssub.s32 %s11, %s18
      %p67 = scmp.eq.s32.totalorder %s66, 0
      %s69 = sadd.s32 %s68, 1
      %s70 = scalar_select %p67, %s68, %s69
      %p73 = pneg %p67
      %p74 = scmp.eq.s32.totalorder %s11, 1
      %p75 = por %p73, %p74
      %p76 = scmp.ne.s32.totalorder %s68, %s71
      %p77 = scmp.eq.s32.totalorder %s11, 0
      %p78 = por %p76, %p77
      %p79 = scmp.ne.s32.totalorder %s68, %s71
      %p80 = scmp.eq.s32.totalorder %s16, 1
      %p81 = por %p79, %p80
      %p82 = scmp.ne.s32.totalorder %s71, %s72
      %p83 = scmp.eq.s32.totalorder %s16, 0
      %p84 = por %p82, %p83
      %p85 = scmp.ne.s32.totalorder %s71, %s72
      %p86 = scmp.eq.s32.totalorder %s17, 1
      %p87 = por %p85, %p86
      %p89 = scmp.ne.s32.totalorder %s72, %s88
      %p90 = scmp.eq.s32.totalorder %s17, 0
      %p91 = por %p89, %p90
      %p92 = scmp.le.s32.totalorder 1, %s11
      %p93 = scmp.lt.s32.totalorder %s11, 3
      %p94 = pnand %p92, %p93
      %p95 = pneg %p94
      // Predicated region
      $region9: #{vec_conv1d.1} parent=5 // pred_check
        _
      $region10: #{vec_conv1d.1} parent=5 // pred_check_branch
        %97 = sbr.rel (%p94) target = $region12
      $region11: #{vec_conv1d.1} parent=5 // pred_region
        %s98 = ssub.s32 %s11, 1
        // Predicated region
        $region13: #{vec_conv1d.1} parent=11 // pred_check
          %p99 = pneg %p58
        $region14: #{vec_conv1d.1} parent=11 // pred_check_branch
          %101 = sbr.rel (%p99) target = $region16
        $region15: #{vec_conv1d.1} parent=11 // pred_region
          _
        $region16: #{vec_conv1d.1} parent=11 // pred_fallthru
          _
      $region12: #{vec_conv1d.1} parent=5 // pred_fallthru
        _
      %p102 = scmp.lt.s32.totalorder %s11, 2
      // Predicated region
      $region17: #{vec_conv1d.1} parent=5 // pred_check
        %p103 = pneg %p102
      $region18: #{vec_conv1d.1} parent=5 // pred_check_branch
        %105 = sbr.rel (%p103) target = $region20
      $region19: #{vec_conv1d.1} parent=5 // pred_region
        // Predicated region
        $region21: #{vec_conv1d.1} parent=19 // pred_check
          %p106 = pneg %p31
        $region22: #{vec_conv1d.1} parent=19 // pred_check_branch
          %108 = sbr.rel (%p106) target = $region24
        $region23: #{vec_conv1d.1} parent=19 // pred_region
          %s109 = smul.u32 3, %s11
          %p110 = scmp.lt.s32.totalorder %s109, 5
          %s111 = scalar_select %p110, %s109, 5
          %s112 = smul.addr %s111, 2
          %s113 = smul.addr %s112, 8
          %s114 = scalar_lea.vmem %s0, %s113
          %s115 = smul.u32 3, %s11
        $region24: #{vec_conv1d.1} parent=19 // pred_fallthru
          _
      $region20: #{vec_conv1d.1} parent=5 // pred_fallthru
        _
      %p116 = scmp.le.s32.totalorder 1, %s11
      %p117 = scmp.lt.s32.totalorder %s11, 3
      %p118 = pnand %p116, %p117
      %p119 = pneg %p118
      // Predicated region
      $region25: #{vec_conv1d.1} parent=5 // pred_check
        _
      $region26: #{vec_conv1d.1} parent=5 // pred_check_branch
        %121 = sbr.rel (%p118) target = $region28
      $region27: #{vec_conv1d.1} parent=5 // pred_region
        %s122 = ssub.s32 %s11, 1
        %s123 = smul.u32 3, %s16
        %p124 = scmp.lt.s32.totalorder %s123, 5
        %s125 = scalar_select %p124, %s123, 5
        %s126 = smul.addr %s125, 2
        %s127 = smul.addr %s126, 8
        %s128 = scalar_lea.vmem %s0, %s127
        %p129 = pneg %p37
        %p130 = pneg %p34
        %p131 = pneg %p58
        %p132 = pneg %p55
        %p133 = pneg %p84
        %p134 = pneg %p81
        %s135 = sand.u32 %s71, 1
        %s136 = scalar_lea.sflag [#allocation4], %s135
        %s137 = sand.u32 %s71, 1
        %s138 = smul.addr %s137, 48
        %s139 = scalar_lea.vmem [#allocation3], %s138
        %s140 = smul.u32 3, %s16
        %p141 = scmp.lt.s32.totalorder %s140, 5
        %s142 = scalar_select %p141, %s140, 5
        %s143 = smul.addr %s142, 2
        %s144 = smul.addr %s143, 8
        %s145 = scalar_lea.vmem %s0, %s144
        %s146 = smul.u32 3, %s16
        %s147 = smul.u32 3, %s16
        %vm148 = vcmask 261120
        %149 = vst.msk [vmem:[#allocation2] sm:$0xff] %vm148, 0.0
        %150 = vst.msk [vmem:[#allocation2 + $0x8] sm:$0xff] %vm148, 0.0
        %151 = vst.msk [vmem:[#allocation2 + $0x10] sm:$0xff] %vm148, 0.0
        %152 = vst.msk [vmem:[#allocation2 + $0x18] sm:$0xff] %vm148, 0.0
        %153 = vst.msk [vmem:[#allocation2 + $0x20] sm:$0xff] %vm148, 0.0
        %154 = vst.msk [vmem:[#allocation2 + $0x28] sm:$0xff] %vm148, 0.0
        %155 = vst.msk [vmem:[#allocation2 + $0x30] sm:$0xff] %vm148, 0.0
        %156 = vst.msk [vmem:[#allocation2 + $0x38] sm:$0xff] %vm148, 0.0
        %157 = vst.msk [vmem:[#allocation2 + $0x40] sm:$0xff] %vm148, 0.0
        %vm158 = vcmask 259072
        %159 = vst.msk [vmem:[#allocation2 + $0x48] sm:$0x3f] %vm158, 0.0
        %v160 = vld [vmem:[%s145] sm:$0xff]
        %v161 = vld [vmem:[%s145 + $0x8] sm:$0xff]
        %162 = vst.msk [vmem:[#allocation2 + $0x3] sm:$0xff] %vm148, %v160
        %163 = vst.msk [vmem:[#allocation2 + $0xb] sm:$0xff] %vm148, %v161
        %s164 = scalar_lea.vmem %s145, 16
        %v165 = vld [vmem:[%s164] sm:$0xff]
        %v166 = vld [vmem:[%s164 + $0x8] sm:$0xff]
        %167 = vst.msk [vmem:[#allocation2 + $0x1b] sm:$0xff] %vm148, %v165
        %168 = vst.msk [vmem:[#allocation2 + $0x23] sm:$0xff] %vm148, %v166
        %s169 = scalar_lea.vmem %s145, 32
        %v170 = vld [vmem:[%s169] sm:$0xff]
        %v171 = vld [vmem:[%s169 + $0x8] sm:$0xff]
        %172 = vst.msk [vmem:[#allocation2 + $0x33] sm:$0xff] %vm148, %v170
        %173 = vst.msk [vmem:[#allocation2 + $0x3b] sm:$0xff] %vm148, %v171
        %v174 = vld [vmem:[#allocation2] sm:$0xff]
        %v175 = vld [vmem:[#allocation2 + $0x8] sm:$0xff]
        %v176 = vld [vmem:[#allocation2 + $0x10] sm:$0xff]
        %v177 = vld [vmem:[#allocation2 + $0x18] sm:$0xff]
        %v178 = vld [vmem:[#allocation2 + $0x20] sm:$0xff]
        %v179 = vld [vmem:[#allocation2 + $0x28] sm:$0xff]
        %v180 = vld [vmem:[#allocation2 + $0x30] sm:$0xff]
        %v181 = vld [vmem:[#allocation2 + $0x38] sm:$0xff]
        %v182 = vld [vmem:[#allocation2 + $0x40] sm:$0xff]
        %v183 = vld [vmem:[%s1] sm:$0xff]
        %v184 = vld [vmem:[%s1 + $0x8] sm:$0xff]
        %v185 = vld [vmem:[%s1 + $0x10] sm:$0xff]
        %v186 = vld [vmem:[%s1 + $0x18] sm:$0xff]
        %v187 = vld [vmem:[#allocation2 + $0x1] sm:$0xff]
        %v188 = vld [vmem:[#allocation2 + $0x9] sm:$0xff]
        %v189 = vld [vmem:[#allocation2 + $0x11] sm:$0xff]
        %v190 = vld [vmem:[#allocation2 + $0x19] sm:$0xff]
        %v191 = vld [vmem:[#allocation2 + $0x21] sm:$0xff]
        %v192 = vld [vmem:[#allocation2 + $0x29] sm:$0xff]
        %v193 = vld [vmem:[#allocation2 + $0x31] sm:$0xff]
        %v194 = vld [vmem:[#allocation2 + $0x39] sm:$0xff]
        %v195 = vld [vmem:[#allocation2 + $0x41] sm:$0xff]
        %s196 = scalar_lea.vmem %s1, 32
        %v197 = vld [vmem:[%s196] sm:$0xff]
        %v198 = vld [vmem:[%s196 + $0x8] sm:$0xff]
        %v199 = vld [vmem:[%s196 + $0x10] sm:$0xff]
        %v200 = vld [vmem:[%s196 + $0x18] sm:$0xff]
        %v202 = vsel %vm148, %v187, 0
        %v205 = vsel %vm148, %v188, 0
        %v208 = vsel %vm148, %v189, 0
        %v211 = vsel %vm148, %v190, 0
        %v214 = vsel %vm148, %v191, 0
        %v217 = vsel %vm148, %v192, 0
        %v220 = vsel %vm148, %v193, 0
        %v223 = vsel %vm148, %v194, 0
        %v226 = vsel %vm148, %v195, 0
        %228 = vmatprep.subr.mxu0 0.0
        %229 = vmatpush1.msra.mxu0 %v197
        %230 = vmatprep.subr.mxu0 0.0
        %231 = vmatpush1.msra.mxu0 %v198
        %232 = vmatprep.subr.mxu0 0.0
        %233 = vmatpush1.msra.mxu0 %v199
        %234 = vmatprep.subr.mxu0 0.0
        %235 = vmatpush1.msra.mxu0 %v200
        %236 = vmatprep.subr.mxu0 0.0
        %237 = vmatpush1.msra.mxu0 0.0
        %238 = vmatprep.subr.mxu0 0.0
        %239 = vmatpush1.msra.mxu0 0.0
        %240 = vmatprep.subr.mxu0 0.0
        %241 = vmatpush1.msra.mxu0 0.0
        %242 = vmatprep.subr.mxu0 0.0
        %243 = vmatpush1.msra.mxu0 0.0
        %244 = vmatprep.subr.mxu0 0.0
        %245 = vmatpush1.msra.mxu0 0.0
        %246 = vmatprep.subr.mxu0 0.0
        %247 = vmatpush1.msra.mxu0 0.0
        %248 = vmatprep.subr.mxu0 0.0
        %249 = vmatpush1.msra.mxu0 0.0
        %250 = vmatprep.subr.mxu0 0.0
        %251 = vmatpush1.msra.mxu0 0.0
        %252 = vmatprep.subr.mxu0 0.0
        %253 = vmatpush1.msra.mxu0 0.0
        %254 = vmatprep.subr.mxu0 0.0
        %255 = vmatpush1.msra.mxu0 0.0
        %256 = vmatprep.subr.mxu0 0.0
        %257 = vmatpush1.msra.mxu0 0.0
        %258 = vmatprep.subr.mxu0 0.0
        %259 = vmatpush1.msra.mxu0 0.0
        %260 = vmatprep.subr.mxu0 0.0
        %261 = vmatpush1.msra.mxu0 0.0
        %262 = vmatprep.subr.mxu0 0.0
        %263 = vmatpush1.msra.mxu0 0.0
        %264 = vmatprep.subr.mxu0 0.0
        %265 = vmatpush1.msra.mxu0 0.0
        %266 = vmatprep.subr.mxu0 0.0
        %267 = vmatpush1.msra.mxu0 0.0
        %268 = vmatprep.subr.mxu0 0.0
        %269 = vmatpush1.msra.mxu0 0.0
        %270 = vmatprep.subr.mxu0 0.0
        %271 = vmatpush1.msra.mxu0 0.0
        %272 = vmatprep.subr.mxu0 0.0
        %273 = vmatpush1.msra.mxu0 0.0
        %274 = vmatprep.subr.mxu0 0.0
        %275 = vmatpush1.msra.mxu0 0.0
        %276 = vmatprep.subr.mxu0 0.0
        %277 = vmatpush1.msra.mxu0 0.0
        %278 = vmatprep.subr.mxu0 0.0
        %279 = vmatpush1.msra.mxu0 0.0
        %280 = vmatprep.subr.mxu0 0.0
        %281 = vmatpush1.msra.mxu0 0.0
        %282 = vmatprep.subr.mxu0 0.0
        %283 = vmatpush1.msra.mxu0 0.0
        %284 = vmatprep.subr.mxu0 0.0
        %285 = vmatpush1.msra.mxu0 0.0
        %286 = vmatprep.subr.mxu0 0.0
        %287 = vmatpush1.msra.mxu0 0.0
        %288 = vmatprep.subr.mxu0 0.0
        %289 = vmatpush1.msra.mxu0 0.0
        %290 = vmatprep.subr.mxu0 0.0
        %291 = vmatpush1.msra.mxu0 0.0
        %292 = vmatprep.mubr.f32.mxu0 0.0
        %293 = vmatmul.mubr.f32.gmra.mrb[0].mxu0 %v202
        %v294 = vpop.f32.mrb[0].mxu0
        %v295 = vadd.f32 0.0, %v294
        %v296 = vpop.f32.mrb[0].mxu0
        %297 = vmatprep.mubr.f32.mxu0 0.0
        %298 = vmatmul.mubr.f32.gmra.mrb[0].mxu0 %v205
        %v299 = vpop.f32.mrb[0].mxu0
        %v300 = vadd.f32 0.0, %v299
        %v301 = vpop.f32.mrb[0].mxu0
        %302 = vmatprep.mubr.f32.mxu0 0.0
        %303 = vmatmul.mubr.f32.gmra.mrb[0].mxu0 %v208
        %v304 = vpop.f32.mrb[0].mxu0
        %v305 = vpop.f32.mrb[0].mxu0
        %306 = vmatprep.mubr.f32.mxu0 0.0
        %307 = vmatmul.mubr.f32.gmra.mrb[0].mxu0 %v211
        %v308 = vpop.f32.mrb[0].mxu0
        %v309 = vadd.f32 0.0, %v308
        %v310 = vpop.f32.mrb[0].mxu0
        %311 = vmatprep.mubr.f32.mxu0 0.0
        %312 = vmatmul.mubr.f32.gmra.mrb[0].mxu0 %v214
        %v313 = vpop.f32.mrb[0].mxu0
        %v314 = vadd.f32 0.0, %v313
        %v315 = vpop.f32.mrb[0].mxu0
        %316 = vmatprep.mubr.f32.mxu0 0.0
        %317 = vmatmul.mubr.f32.gmra.mrb[0].mxu0 %v217
        %v318 = vpop.f32.mrb[0].mxu0
        %v319 = vpop.f32.mrb[0].mxu0
        %320 = vmatprep.mubr.f32.mxu0 0.0
        %321 = vmatmul.mubr.f32.gmra.mrb[0].mxu0 %v220
        %v322 = vpop.f32.mrb[0].mxu0
        %v323 = vadd.f32 0.0, %v322
        %v324 = vpop.f32.mrb[0].mxu0
        %325 = vmatprep.mubr.f32.mxu0 0.0
        %326 = vmatmul.mubr.f32.gmra.mrb[0].mxu0 %v223
        %v327 = vpop.f32.mrb[0].mxu0
        %v328 = vadd.f32 0.0, %v327
        %v329 = vpop.f32.mrb[0].mxu0
        %330 = vmatprep.mubr.f32.mxu0 0.0
        %331 = vmatmul.mubr.f32.gmra.mrb[0].mxu0 %v226
        %v332 = vpop.f32.mrb[0].mxu0
        %v333 = vpop.f32.mrb[0].mxu0
        %334 = vdwg.mxu0
        %v336 = vsel %vm148, %v174, 0
        %v339 = vsel %vm148, %v175, 0
        %v342 = vsel %vm148, %v176, 0
        %v345 = vsel %vm148, %v177, 0
        %v348 = vsel %vm148, %v178, 0
        %v351 = vsel %vm148, %v179, 0
        %v354 = vsel %vm148, %v180, 0
        %v357 = vsel %vm148, %v181, 0
        %v360 = vsel %vm148, %v182, 0
        %362 = vmatprep.subr.mxu0 0.0
        %363 = vmatpush1.msra.mxu0 %v183
        %364 = vmatprep.subr.mxu0 0.0
        %365 = vmatpush1.msra.mxu0 %v184
        %366 = vmatprep.subr.mxu0 0.0
        %367 = vmatpush1.msra.mxu0 %v185
        %368 = vmatprep.subr.mxu0 0.0
        %369 = vmatpush1.msra.mxu0 %v186
        %370 = vmatprep.subr.mxu0 0.0
        %371 = vmatpush1.msra.mxu0 0.0
        %372 = vmatprep.subr.mxu0 0.0
        %373 = vmatpush1.msra.mxu0 0.0
        %374 = vmatprep.subr.mxu0 0.0
        %375 = vmatpush1.msra.mxu0 0.0
        %376 = vmatprep.subr.mxu0 0.0
        %377 = vmatpush1.msra.mxu0 0.0
        %378 = vmatprep.subr.mxu0 0.0
        %379 = vmatpush1.msra.mxu0 0.0
        %380 = vmatprep.subr.mxu0 0.0
        %381 = vmatpush1.msra.mxu0 0.0
        %382 = vmatprep.subr.mxu0 0.0
        %383 = vmatpush1.msra.mxu0 0.0
        %384 = vmatprep.subr.mxu0 0.0
        %385 = vmatpush1.msra.mxu0 0.0
        %386 = vmatprep.subr.mxu0 0.0
        %387 = vmatpush1.msra.mxu0 0.0
        %388 = vmatprep.subr.mxu0 0.0
        %389 = vmatpush1.msra.mxu0 0.0
        %390 = vmatprep.subr.mxu0 0.0
        %391 = vmatpush1.msra.mxu0 0.0
        %392 = vmatprep.subr.mxu0 0.0
        %393 = vmatpush1.msra.mxu0 0.0
        %394 = vmatprep.subr.mxu0 0.0
        %395 = vmatpush1.msra.mxu0 0.0
        %396 = vmatprep.subr.mxu0 0.0
        %397 = vmatpush1.msra.mxu0 0.0
        %398 = vmatprep.subr.mxu0 0.0
        %399 = vmatpush1.msra.mxu0 0.0
        %400 = vmatprep.subr.mxu0 0.0
        %401 = vmatpush1.msra.mxu0 0.0
        %402 = vmatprep.subr.mxu0 0.0
        %403 = vmatpush1.msra.mxu0 0.0
        %404 = vmatprep.subr.mxu0 0.0
        %405 = vmatpush1.msra.mxu0 0.0
        %406 = vmatprep.subr.mxu0 0.0
        %407 = vmatpush1.msra.mxu0 0.0
        %408 = vmatprep.subr.mxu0 0.0
        %409 = vmatpush1.msra.mxu0 0.0
        %410 = vmatprep.subr.mxu0 0.0
        %411 = vmatpush1.msra.mxu0 0.0
        %412 = vmatprep.subr.mxu0 0.0
        %413 = vmatpush1.msra.mxu0 0.0
        %414 = vmatprep.subr.mxu0 0.0
        %415 = vmatpush1.msra.mxu0 0.0
        %416 = vmatprep.subr.mxu0 0.0
        %417 = vmatpush1.msra.mxu0 0.0
        %418 = vmatprep.subr.mxu0 0.0
        %419 = vmatpush1.msra.mxu0 0.0
        %420 = vmatprep.subr.mxu0 0.0
        %421 = vmatpush1.msra.mxu0 0.0
        %422 = vmatprep.subr.mxu0 0.0
        %423 = vmatpush1.msra.mxu0 0.0
        %424 = vmatprep.subr.mxu0 0.0
        %425 = vmatpush1.msra.mxu0 0.0
        %426 = vmatprep.mubr.f32.mxu0 0.0
        %427 = vmatmul.mubr.f32.gmra.mrb[0].mxu0 %v336
        %v428 = vpop.f32.mrb[0].mxu0
        %v429 = vadd.f32 %v295, %v428
        %v430 = vpop.f32.mrb[0].mxu0
        %431 = vmatprep.mubr.f32.mxu0 0.0
        %432 = vmatmul.mubr.f32.gmra.mrb[0].mxu0 %v339
        %v433 = vpop.f32.mrb[0].mxu0
        %v434 = vadd.f32 %v300, %v433
        %v435 = vpop.f32.mrb[0].mxu0
        %436 = vmatprep.mubr.f32.mxu0 0.0
        %437 = vmatmul.mubr.f32.gmra.mrb[0].mxu0 %v342
        %v438 = vpop.f32.mrb[0].mxu0
        %v439 = vpop.f32.mrb[0].mxu0
        %440 = vmatprep.mubr.f32.mxu0 0.0
        %441 = vmatmul.mubr.f32.gmra.mrb[0].mxu0 %v345
        %v442 = vpop.f32.mrb[0].mxu0
        %v443 = vadd.f32 %v309, %v442
        %v444 = vpop.f32.mrb[0].mxu0
        %445 = vmatprep.mubr.f32.mxu0 0.0
        %446 = vmatmul.mubr.f32.gmra.mrb[0].mxu0 %v348
        %v447 = vpop.f32.mrb[0].mxu0
        %v448 = vadd.f32 %v314, %v447
        %v449 = vpop.f32.mrb[0].mxu0
        %450 = vmatprep.mubr.f32.mxu0 0.0
        %451 = vmatmul.mubr.f32.gmra.mrb[0].mxu0 %v351
        %v452 = vpop.f32.mrb[0].mxu0
        %v453 = vpop.f32.mrb[0].mxu0
        %454 = vmatprep.mubr.f32.mxu0 0.0
        %455 = vmatmul.mubr.f32.gmra.mrb[0].mxu0 %v354
        %v456 = vpop.f32.mrb[0].mxu0
        %v457 = vadd.f32 %v323, %v456
        %v458 = vpop.f32.mrb[0].mxu0
        %459 = vmatprep.mubr.f32.mxu0 0.0
        %460 = vmatmul.mubr.f32.gmra.mrb[0].mxu0 %v357
        %v461 = vpop.f32.mrb[0].mxu0
        %v462 = vadd.f32 %v328, %v461
        %v463 = vpop.f32.mrb[0].mxu0
        %464 = vmatprep.mubr.f32.mxu0 0.0
        %465 = vmatmul.mubr.f32.gmra.mrb[0].mxu0 %v360
        %v466 = vpop.f32.mrb[0].mxu0
        %v467 = vpop.f32.mrb[0].mxu0
        %468 = vdwg.mxu0
        %v469 = vld [vmem:[#allocation2 + $0x2] sm:$0xff]
        %v470 = vld [vmem:[#allocation2 + $0xa] sm:$0xff]
        %v471 = vld [vmem:[#allocation2 + $0x12] sm:$0xff]
        %v472 = vld [vmem:[#allocation2 + $0x1a] sm:$0xff]
        %v473 = vld [vmem:[#allocation2 + $0x22] sm:$0xff]
        %v474 = vld [vmem:[#allocation2 + $0x2a] sm:$0xff]
        %v475 = vld [vmem:[#allocation2 + $0x32] sm:$0xff]
        %v476 = vld [vmem:[#allocation2 + $0x3a] sm:$0xff]
        %v477 = vld [vmem:[#allocation2 + $0x42] sm:$0xff]
        %s478 = scalar_lea.vmem %s1, 64
        %v479 = vld [vmem:[%s478] sm:$0xff]
        %v480 = vld [vmem:[%s478 + $0x8] sm:$0xff]
        %v481 = vld [vmem:[%s478 + $0x10] sm:$0xff]
        %v482 = vld [vmem:[%s478 + $0x18] sm:$0xff]
        %v484 = vsel %vm148, %v469, 0
        %v487 = vsel %vm148, %v470, 0
        %v490 = vsel %vm148, %v471, 0
        %v493 = vsel %vm148, %v472, 0
        %v496 = vsel %vm148, %v473, 0
        %v499 = vsel %vm148, %v474, 0
        %v502 = vsel %vm148, %v475, 0
        %v505 = vsel %vm148, %v476, 0
        %v508 = vsel %vm148, %v477, 0
        %510 = vmatprep.subr.mxu0 0.0
        %511 = vmatpush1.msra.mxu0 %v479
        %512 = vmatprep.subr.mxu0 0.0
        %513 = vmatpush1.msra.mxu0 %v480
        %514 = vmatprep.subr.mxu0 0.0
        %515 = vmatpush1.msra.mxu0 %v481
        %516 = vmatprep.subr.mxu0 0.0
        %517 = vmatpush1.msra.mxu0 %v482
        %518 = vmatprep.subr.mxu0 0.0
        %519 = vmatpush1.msra.mxu0 0.0
        %520 = vmatprep.subr.mxu0 0.0
        %521 = vmatpush1.msra.mxu0 0.0
        %522 = vmatprep.subr.mxu0 0.0
        %523 = vmatpush1.msra.mxu0 0.0
        %524 = vmatprep.subr.mxu0 0.0
        %525 = vmatpush1.msra.mxu0 0.0
        %526 = vmatprep.subr.mxu0 0.0
        %527 = vmatpush1.msra.mxu0 0.0
        %528 = vmatprep.subr.mxu0 0.0
        %529 = vmatpush1.msra.mxu0 0.0
        %530 = vmatprep.subr.mxu0 0.0
        %531 = vmatpush1.msra.mxu0 0.0
        %532 = vmatprep.subr.mxu0 0.0
        %533 = vmatpush1.msra.mxu0 0.0
        %534 = vmatprep.subr.mxu0 0.0
        %535 = vmatpush1.msra.mxu0 0.0
        %536 = vmatprep.subr.mxu0 0.0
        %537 = vmatpush1.msra.mxu0 0.0
        %538 = vmatprep.subr.mxu0 0.0
        %539 = vmatpush1.msra.mxu0 0.0
        %540 = vmatprep.subr.mxu0 0.0
        %541 = vmatpush1.msra.mxu0 0.0
        %542 = vmatprep.subr.mxu0 0.0
        %543 = vmatpush1.msra.mxu0 0.0
        %544 = vmatprep.subr.mxu0 0.0
        %545 = vmatpush1.msra.mxu0 0.0
        %546 = vmatprep.subr.mxu0 0.0
        %547 = vmatpush1.msra.mxu0 0.0
        %548 = vmatprep.subr.mxu0 0.0
        %549 = vmatpush1.msra.mxu0 0.0
        %550 = vmatprep.subr.mxu0 0.0
        %551 = vmatpush1.msra.mxu0 0.0
        %552 = vmatprep.subr.mxu0 0.0
        %553 = vmatpush1.msra.mxu0 0.0
        %554 = vmatprep.subr.mxu0 0.0
        %555 = vmatpush1.msra.mxu0 0.0
        %556 = vmatprep.subr.mxu0 0.0
        %557 = vmatpush1.msra.mxu0 0.0
        %558 = vmatprep.subr.mxu0 0.0
        %559 = vmatpush1.msra.mxu0 0.0
        %560 = vmatprep.subr.mxu0 0.0
        %561 = vmatpush1.msra.mxu0 0.0
        %562 = vmatprep.subr.mxu0 0.0
        %563 = vmatpush1.msra.mxu0 0.0
        %564 = vmatprep.subr.mxu0 0.0
        %565 = vmatpush1.msra.mxu0 0.0
        %566 = vmatprep.subr.mxu0 0.0
        %567 = vmatpush1.msra.mxu0 0.0
        %568 = vmatprep.subr.mxu0 0.0
        %569 = vmatpush1.msra.mxu0 0.0
        %570 = vmatprep.subr.mxu0 0.0
        %571 = vmatpush1.msra.mxu0 0.0
        %572 = vmatprep.subr.mxu0 0.0
        %573 = vmatpush1.msra.mxu0 0.0
        %574 = vmatprep.mubr.f32.mxu0 0.0
        %575 = vmatmul.mubr.f32.gmra.mrb[0].mxu0 %v484
        %v576 = vpop.f32.mrb[0].mxu0
        %v577 = vadd.f32 0.0, %v576
        %v578 = vpop.f32.mrb[0].mxu0
        %579 = vmatprep.mubr.f32.mxu0 0.0
        %580 = vmatmul.mubr.f32.gmra.mrb[0].mxu0 %v487
        %v581 = vpop.f32.mrb[0].mxu0
        %v582 = vadd.f32 0.0, %v581
        %v583 = vpop.f32.mrb[0].mxu0
        %584 = vmatprep.mubr.f32.mxu0 0.0
        %585 = vmatmul.mubr.f32.gmra.mrb[0].mxu0 %v490
        %v586 = vpop.f32.mrb[0].mxu0
        %v587 = vpop.f32.mrb[0].mxu0
        %588 = vmatprep.mubr.f32.mxu0 0.0
        %589 = vmatmul.mubr.f32.gmra.mrb[0].mxu0 %v493
        %v590 = vpop.f32.mrb[0].mxu0
        %v591 = vadd.f32 0.0, %v590
        %v592 = vpop.f32.mrb[0].mxu0
        %593 = vmatprep.mubr.f32.mxu0 0.0
        %594 = vmatmul.mubr.f32.gmra.mrb[0].mxu0 %v496
        %v595 = vpop.f32.mrb[0].mxu0
        %v596 = vadd.f32 0.0, %v595
        %v597 = vpop.f32.mrb[0].mxu0
        %598 = vmatprep.mubr.f32.mxu0 0.0
        %599 = vmatmul.mubr.f32.gmra.mrb[0].mxu0 %v499
        %v600 = vpop.f32.mrb[0].mxu0
        %v601 = vpop.f32.mrb[0].mxu0
        %602 = vmatprep.mubr.f32.mxu0 0.0
        %603 = vmatmul.mubr.f32.gmra.mrb[0].mxu0 %v502
        %v604 = vpop.f32.mrb[0].mxu0
        %v605 = vadd.f32 0.0, %v604
        %v606 = vpop.f32.mrb[0].mxu0
        %607 = vmatprep.mubr.f32.mxu0 0.0
        %608 = vmatmul.mubr.f32.gmra.mrb[0].mxu0 %v505
        %v609 = vpop.f32.mrb[0].mxu0
        %v610 = vadd.f32 0.0, %v609
        %v611 = vpop.f32.mrb[0].mxu0
        %612 = vmatprep.mubr.f32.mxu0 0.0
        %613 = vmatmul.mubr.f32.gmra.mrb[0].mxu0 %v508
        %v614 = vpop.f32.mrb[0].mxu0
        %v615 = vpop.f32.mrb[0].mxu0
        %616 = vdwg.mxu0
        %v617 = vadd.f32 %v429, %v577
        %v618 = vadd.f32 %v434, %v582
        %v619 = vadd.f32 %v443, %v591
        %v620 = vadd.f32 %v448, %v596
        %v621 = vadd.f32 %v457, %v605
        %v622 = vadd.f32 %v462, %v610
        %v623 = vld [vmem:[#allocation2 + $0x3] sm:$0xff]
        %v624 = vld [vmem:[#allocation2 + $0xb] sm:$0xff]
        %v625 = vld [vmem:[#allocation2 + $0x13] sm:$0xff]
        %v626 = vld [vmem:[#allocation2 + $0x1b] sm:$0xff]
        %v627 = vld [vmem:[#allocation2 + $0x23] sm:$0xff]
        %v628 = vld [vmem:[#allocation2 + $0x2b] sm:$0xff]
        %v629 = vld [vmem:[#allocation2 + $0x33] sm:$0xff]
        %v630 = vld [vmem:[#allocation2 + $0x3b] sm:$0xff]
        %v631 = vld [vmem:[#allocation2 + $0x43] sm:$0xff]
        %s632 = scalar_lea.vmem %s1, 96
        %v633 = vld [vmem:[%s632] sm:$0xff]
        %v634 = vld [vmem:[%s632 + $0x8] sm:$0xff]
        %v635 = vld [vmem:[%s632 + $0x10] sm:$0xff]
        %v636 = vld [vmem:[%s632 + $0x18] sm:$0xff]
        %v638 = vsel %vm148, %v623, 0
        %v641 = vsel %vm148, %v624, 0
        %v644 = vsel %vm148, %v625, 0
        %v647 = vsel %vm148, %v626, 0
        %v650 = vsel %vm148, %v627, 0
        %v653 = vsel %vm148, %v628, 0
        %v656 = vsel %vm148, %v629, 0
        %v659 = vsel %vm148, %v630, 0
        %v662 = vsel %vm148, %v631, 0
        %664 = vmatprep.subr.mxu0 0.0
        %665 = vmatpush1.msra.mxu0 %v633
        %666 = vmatprep.subr.mxu0 0.0
        %667 = vmatpush1.msra.mxu0 %v634
        %668 = vmatprep.subr.mxu0 0.0
        %669 = vmatpush1.msra.mxu0 %v635
        %670 = vmatprep.subr.mxu0 0.0
        %671 = vmatpush1.msra.mxu0 %v636
        %672 = vmatprep.subr.mxu0 0.0
        %673 = vmatpush1.msra.mxu0 0.0
        %674 = vmatprep.subr.mxu0 0.0
        %675 = vmatpush1.msra.mxu0 0.0
        %676 = vmatprep.subr.mxu0 0.0
        %677 = vmatpush1.msra.mxu0 0.0
        %678 = vmatprep.subr.mxu0 0.0
        %679 = vmatpush1.msra.mxu0 0.0
        %680 = vmatprep.subr.mxu0 0.0
        %681 = vmatpush1.msra.mxu0 0.0
        %682 = vmatprep.subr.mxu0 0.0
        %683 = vmatpush1.msra.mxu0 0.0
        %684 = vmatprep.subr.mxu0 0.0
        %685 = vmatpush1.msra.mxu0 0.0
        %686 = vmatprep.subr.mxu0 0.0
        %687 = vmatpush1.msra.mxu0 0.0
        %688 = vmatprep.subr.mxu0 0.0
        %689 = vmatpush1.msra.mxu0 0.0
        %690 = vmatprep.subr.mxu0 0.0
        %691 = vmatpush1.msra.mxu0 0.0
        %692 = vmatprep.subr.mxu0 0.0
        %693 = vmatpush1.msra.mxu0 0.0
        %694 = vmatprep.subr.mxu0 0.0
        %695 = vmatpush1.msra.mxu0 0.0
        %696 = vmatprep.subr.mxu0 0.0
        %697 = vmatpush1.msra.mxu0 0.0
        %698 = vmatprep.subr.mxu0 0.0
        %699 = vmatpush1.msra.mxu0 0.0
        %700 = vmatprep.subr.mxu0 0.0
        %701 = vmatpush1.msra.mxu0 0.0
        %702 = vmatprep.subr.mxu0 0.0
        %703 = vmatpush1.msra.mxu0 0.0
        %704 = vmatprep.subr.mxu0 0.0
        %705 = vmatpush1.msra.mxu0 0.0
        %706 = vmatprep.subr.mxu0 0.0
        %707 = vmatpush1.msra.mxu0 0.0
        %708 = vmatprep.subr.mxu0 0.0
        %709 = vmatpush1.msra.mxu0 0.0
        %710 = vmatprep.subr.mxu0 0.0
        %711 = vmatpush1.msra.mxu0 0.0
        %712 = vmatprep.subr.mxu0 0.0
        %713 = vmatpush1.msra.mxu0 0.0
        %714 = vmatprep.subr.mxu0 0.0
        %715 = vmatpush1.msra.mxu0 0.0
        %716 = vmatprep.subr.mxu0 0.0
        %717 = vmatpush1.msra.mxu0 0.0
        %718 = vmatprep.subr.mxu0 0.0
        %719 = vmatpush1.msra.mxu0 0.0
        %720 = vmatprep.subr.mxu0 0.0
        %721 = vmatpush1.msra.mxu0 0.0
        %722 = vmatprep.subr.mxu0 0.0
        %723 = vmatpush1.msra.mxu0 0.0
        %724 = vmatprep.subr.mxu0 0.0
        %725 = vmatpush1.msra.mxu0 0.0
        %726 = vmatprep.subr.mxu0 0.0
        %727 = vmatpush1.msra.mxu0 0.0
        %728 = vmatprep.mubr.f32.mxu0 0.0
        %729 = vmatmul.mubr.f32.gmra.mrb[0].mxu0 %v638
        %v730 = vpop.f32.mrb[0].mxu0
        %v731 = vadd.f32 0.0, %v730
        %v732 = vpop.f32.mrb[0].mxu0
        %733 = vmatprep.mubr.f32.mxu0 0.0
        %734 = vmatmul.mubr.f32.gmra.mrb[0].mxu0 %v641
        %v735 = vpop.f32.mrb[0].mxu0
        %v736 = vadd.f32 0.0, %v735
        %v737 = vpop.f32.mrb[0].mxu0
        %738 = vmatprep.mubr.f32.mxu0 0.0
        %739 = vmatmul.mubr.f32.gmra.mrb[0].mxu0 %v644
        %v740 = vpop.f32.mrb[0].mxu0
        %v741 = vpop.f32.mrb[0].mxu0
        %742 = vmatprep.mubr.f32.mxu0 0.0
        %743 = vmatmul.mubr.f32.gmra.mrb[0].mxu0 %v647
        %v744 = vpop.f32.mrb[0].mxu0
        %v745 = vadd.f32 0.0, %v744
        %v746 = vpop.f32.mrb[0].mxu0
        %747 = vmatprep.mubr.f32.mxu0 0.0
        %748 = vmatmul.mubr.f32.gmra.mrb[0].mxu0 %v650
        %v749 = vpop.f32.mrb[0].mxu0
        %v750 = vadd.f32 0.0, %v749
        %v751 = vpop.f32.mrb[0].mxu0
        %752 = vmatprep.mubr.f32.mxu0 0.0
        %753 = vmatmul.mubr.f32.gmra.mrb[0].mxu0 %v653
        %v754 = vpop.f32.mrb[0].mxu0
        %v755 = vpop.f32.mrb[0].mxu0
        %756 = vmatprep.mubr.f32.mxu0 0.0
        %757 = vmatmul.mubr.f32.gmra.mrb[0].mxu0 %v656
        %v758 = vpop.f32.mrb[0].mxu0
        %v759 = vadd.f32 0.0, %v758
        %v760 = vpop.f32.mrb[0].mxu0
        %761 = vmatprep.mubr.f32.mxu0 0.0
        %762 = vmatmul.mubr.f32.gmra.mrb[0].mxu0 %v659
        %v763 = vpop.f32.mrb[0].mxu0
        %v764 = vadd.f32 0.0, %v763
        %v765 = vpop.f32.mrb[0].mxu0
        %766 = vmatprep.mubr.f32.mxu0 0.0
        %767 = vmatmul.mubr.f32.gmra.mrb[0].mxu0 %v662
        %v768 = vpop.f32.mrb[0].mxu0
        %v769 = vpop.f32.mrb[0].mxu0
        %770 = vdwg.mxu0
        %v771 = vadd.f32 %v617, %v731
        %v772 = vadd.f32 %v618, %v736
        %v773 = vadd.f32 %v619, %v745
        %v774 = vadd.f32 %v620, %v750
        %v775 = vadd.f32 %v621, %v759
        %v776 = vadd.f32 %v622, %v764
        %v777 = vld [vmem:[#allocation2 + $0x4] sm:$0xff]
        %v778 = vld [vmem:[#allocation2 + $0xc] sm:$0xff]
        %v779 = vld [vmem:[#allocation2 + $0x14] sm:$0xff]
        %v780 = vld [vmem:[#allocation2 + $0x1c] sm:$0xff]
        %v781 = vld [vmem:[#allocation2 + $0x24] sm:$0xff]
        %v782 = vld [vmem:[#allocation2 + $0x2c] sm:$0xff]
        %v783 = vld [vmem:[#allocation2 + $0x34] sm:$0xff]
        %v784 = vld [vmem:[#allocation2 + $0x3c] sm:$0xff]
        %v785 = vld [vmem:[#allocation2 + $0x44] sm:$0xff]
        %s786 = scalar_lea.vmem %s1, 128
        %v787 = vld [vmem:[%s786] sm:$0xff]
        %v788 = vld [vmem:[%s786 + $0x8] sm:$0xff]
        %v789 = vld [vmem:[%s786 + $0x10] sm:$0xff]
        %v790 = vld [vmem:[%s786 + $0x18] sm:$0xff]
        %v792 = vsel %vm148, %v777, 0
        %v795 = vsel %vm148, %v778, 0
        %v798 = vsel %vm148, %v779, 0
        %v801 = vsel %vm148, %v780, 0
        %v804 = vsel %vm148, %v781, 0
        %v807 = vsel %vm148, %v782, 0
        %v810 = vsel %vm148, %v783, 0
        %v813 = vsel %vm148, %v784, 0
        %v816 = vsel %vm148, %v785, 0
        %818 = vmatprep.subr.mxu0 0.0
        %819 = vmatpush1.msra.mxu0 %v787
        %820 = vmatprep.subr.mxu0 0.0
        %821 = vmatpush1.msra.mxu0 %v788
        %822 = vmatprep.subr.mxu0 0.0
        %823 = vmatpush1.msra.mxu0 %v789
        %824 = vmatprep.subr.mxu0 0.0
        %825 = vmatpush1.msra.mxu0 %v790
        %826 = vmatprep.subr.mxu0 0.0
        %827 = vmatpush1.msra.mxu0 0.0
        %828 = vmatprep.subr.mxu0 0.0
        %829 = vmatpush1.msra.mxu0 0.0
        %830 = vmatprep.subr.mxu0 0.0
        %831 = vmatpush1.msra.mxu0 0.0
        %832 = vmatprep.subr.mxu0 0.0
        %833 = vmatpush1.msra.mxu0 0.0
        %834 = vmatprep.subr.mxu0 0.0
        %835 = vmatpush1.msra.mxu0 0.0
        %836 = vmatprep.subr.mxu0 0.0
        %837 = vmatpush1.msra.mxu0 0.0
        %838 = vmatprep.subr.mxu0 0.0
        %839 = vmatpush1.msra.mxu0 0.0
        %840 = vmatprep.subr.mxu0 0.0
        %841 = vmatpush1.msra.mxu0 0.0
        %842 = vmatprep.subr.mxu0 0.0
        %843 = vmatpush1.msra.mxu0 0.0
        %844 = vmatprep.subr.mxu0 0.0
        %845 = vmatpush1.msra.mxu0 0.0
        %846 = vmatprep.subr.mxu0 0.0
        %847 = vmatpush1.msra.mxu0 0.0
        %848 = vmatprep.subr.mxu0 0.0
        %849 = vmatpush1.msra.mxu0 0.0
        %850 = vmatprep.subr.mxu0 0.0
        %851 = vmatpush1.msra.mxu0 0.0
        %852 = vmatprep.subr.mxu0 0.0
        %853 = vmatpush1.msra.mxu0 0.0
        %854 = vmatprep.subr.mxu0 0.0
        %855 = vmatpush1.msra.mxu0 0.0
        %856 = vmatprep.subr.mxu0 0.0
        %857 = vmatpush1.msra.mxu0 0.0
        %858 = vmatprep.subr.mxu0 0.0
        %859 = vmatpush1.msra.mxu0 0.0
        %860 = vmatprep.subr.mxu0 0.0
        %861 = vmatpush1.msra.mxu0 0.0
        %862 = vmatprep.subr.mxu0 0.0
        %863 = vmatpush1.msra.mxu0 0.0
        %864 = vmatprep.subr.mxu0 0.0
        %865 = vmatpush1.msra.mxu0 0.0
        %866 = vmatprep.subr.mxu0 0.0
        %867 = vmatpush1.msra.mxu0 0.0
        %868 = vmatprep.subr.mxu0 0.0
        %869 = vmatpush1.msra.mxu0 0.0
        %870 = vmatprep.subr.mxu0 0.0
        %871 = vmatpush1.msra.mxu0 0.0
        %872 = vmatprep.subr.mxu0 0.0
        %873 = vmatpush1.msra.mxu0 0.0
        %874 = vmatprep.subr.mxu0 0.0
        %875 = vmatpush1.msra.mxu0 0.0
        %876 = vmatprep.subr.mxu0 0.0
        %877 = vmatpush1.msra.mxu0 0.0
        %878 = vmatprep.subr.mxu0 0.0
        %879 = vmatpush1.msra.mxu0 0.0
        %880 = vmatprep.subr.mxu0 0.0
        %881 = vmatpush1.msra.mxu0 0.0
        %882 = vmatprep.mubr.f32.mxu0 0.0
        %883 = vmatmul.mubr.f32.gmra.mrb[0].mxu0 %v792
        %v884 = vpop.f32.mrb[0].mxu0
        %v885 = vadd.f32 0.0, %v884
        %v886 = vpop.f32.mrb[0].mxu0
        %887 = vmatprep.mubr.f32.mxu0 0.0
        %888 = vmatmul.mubr.f32.gmra.mrb[0].mxu0 %v795
        %v889 = vpop.f32.mrb[0].mxu0
        %v890 = vadd.f32 0.0, %v889
        %v891 = vpop.f32.mrb[0].mxu0
        %892 = vmatprep.mubr.f32.mxu0 0.0
        %893 = vmatmul.mubr.f32.gmra.mrb[0].mxu0 %v798
        %v894 = vpop.f32.mrb[0].mxu0
        %v895 = vpop.f32.mrb[0].mxu0
        %896 = vmatprep.mubr.f32.mxu0 0.0
        %897 = vmatmul.mubr.f32.gmra.mrb[0].mxu0 %v801
        %v898 = vpop.f32.mrb[0].mxu0
        %v899 = vadd.f32 0.0, %v898
        %v900 = vpop.f32.mrb[0].mxu0
        %901 = vmatprep.mubr.f32.mxu0 0.0
        %902 = vmatmul.mubr.f32.gmra.mrb[0].mxu0 %v804
        %v903 = vpop.f32.mrb[0].mxu0
        %v904 = vadd.f32 0.0, %v903
        %v905 = vpop.f32.mrb[0].mxu0
        %906 = vmatprep.mubr.f32.mxu0 0.0
        %907 = vmatmul.mubr.f32.gmra.mrb[0].mxu0 %v807
        %v908 = vpop.f32.mrb[0].mxu0
        %v909 = vpop.f32.mrb[0].mxu0
        %910 = vmatprep.mubr.f32.mxu0 0.0
        %911 = vmatmul.mubr.f32.gmra.mrb[0].mxu0 %v810
        %v912 = vpop.f32.mrb[0].mxu0
        %v913 = vadd.f32 0.0, %v912
        %v914 = vpop.f32.mrb[0].mxu0
        %915 = vmatprep.mubr.f32.mxu0 0.0
        %916 = vmatmul.mubr.f32.gmra.mrb[0].mxu0 %v813
        %v917 = vpop.f32.mrb[0].mxu0
        %v918 = vadd.f32 0.0, %v917
        %v919 = vpop.f32.mrb[0].mxu0
        %920 = vmatprep.mubr.f32.mxu0 0.0
        %921 = vmatmul.mubr.f32.gmra.mrb[0].mxu0 %v816
        %v922 = vpop.f32.mrb[0].mxu0
        %v923 = vpop.f32.mrb[0].mxu0
        %924 = vdwg.mxu0
        %v925 = vadd.f32 %v771, %v885
        %v926 = vadd.f32 %v772, %v890
        %v927 = vadd.f32 %v773, %v899
        %v928 = vadd.f32 %v774, %v904
        %v929 = vadd.f32 %v775, %v913
        %v930 = vadd.f32 %v776, %v918
        %v931 = vld [vmem:[#allocation2 + $0x5] sm:$0xff]
        %v932 = vld [vmem:[#allocation2 + $0xd] sm:$0xff]
        %v933 = vld [vmem:[#allocation2 + $0x15] sm:$0xff]
        %v934 = vld [vmem:[#allocation2 + $0x1d] sm:$0xff]
        %v935 = vld [vmem:[#allocation2 + $0x25] sm:$0xff]
        %v936 = vld [vmem:[#allocation2 + $0x2d] sm:$0xff]
        %v937 = vld [vmem:[#allocation2 + $0x35] sm:$0xff]
        %v938 = vld [vmem:[#allocation2 + $0x3d] sm:$0xff]
        %v939 = vld [vmem:[#allocation2 + $0x45] sm:$0xff]
        %s940 = scalar_lea.vmem %s1, 160
        %v941 = vld [vmem:[%s940] sm:$0xff]
        %v942 = vld [vmem:[%s940 + $0x8] sm:$0xff]
        %v943 = vld [vmem:[%s940 + $0x10] sm:$0xff]
        %v944 = vld [vmem:[%s940 + $0x18] sm:$0xff]
        %v946 = vsel %vm148, %v931, 0
        %v949 = vsel %vm148, %v932, 0
        %v952 = vsel %vm148, %v933, 0
        %v955 = vsel %vm148, %v934, 0
        %v958 = vsel %vm148, %v935, 0
        %v961 = vsel %vm148, %v936, 0
        %v964 = vsel %vm148, %v937, 0
        %v967 = vsel %vm148, %v938, 0
        %v970 = vsel %vm148, %v939, 0
        %972 = vmatprep.subr.mxu0 0.0
        %973 = vmatpush1.msra.mxu0 %v941
        %974 = vmatprep.subr.mxu0 0.0
        %975 = vmatpush1.msra.mxu0 %v942
        %976 = vmatprep.subr.mxu0 0.0
        %977 = vmatpush1.msra.mxu0 %v943
        %978 = vmatprep.subr.mxu0 0.0
        %979 = vmatpush1.msra.mxu0 %v944
        %980 = vmatprep.subr.mxu0 0.0
        %981 = vmatpush1.msra.mxu0 0.0
        %982 = vmatprep.subr.mxu0 0.0
        %983 = vmatpush1.msra.mxu0 0.0
        %984 = vmatprep.subr.mxu0 0.0
        %985 = vmatpush1.msra.mxu0 0.0
        %986 = vmatprep.subr.mxu0 0.0
        %987 = vmatpush1.msra.mxu0 0.0
        %988 = vmatprep.subr.mxu0 0.0
        %989 = vmatpush1.msra.mxu0 0.0
        %990 = vmatprep.subr.mxu0 0.0
        %991 = vmatpush1.msra.mxu0 0.0
        %992 = vmatprep.subr.mxu0 0.0
        %993 = vmatpush1.msra.mxu0 0.0
        %994 = vmatprep.subr.mxu0 0.0
        %995 = vmatpush1.msra.mxu0 0.0
        %996 = vmatprep.subr.mxu0 0.0
        %997 = vmatpush1.msra.mxu0 0.0
        %998 = vmatprep.subr.mxu0 0.0
        %999 = vmatpush1.msra.mxu0 0.0
        %1000 = vmatprep.subr.mxu0 0.0
        %1001 = vmatpush1.msra.mxu0 0.0
        %1002 = vmatprep.subr.mxu0 0.0
        %1003 = vmatpush1.msra.mxu0 0.0
        %1004 = vmatprep.subr.mxu0 0.0
        %1005 = vmatpush1.msra.mxu0 0.0
        %1006 = vmatprep.subr.mxu0 0.0
        %1007 = vmatpush1.msra.mxu0 0.0
        %1008 = vmatprep.subr.mxu0 0.0
        %1009 = vmatpush1.msra.mxu0 0.0
        %1010 = vmatprep.subr.mxu0 0.0
        %1011 = vmatpush1.msra.mxu0 0.0
        %1012 = vmatprep.subr.mxu0 0.0
        %1013 = vmatpush1.msra.mxu0 0.0
        %1014 = vmatprep.subr.mxu0 0.0
        %1015 = vmatpush1.msra.mxu0 0.0
        %1016 = vmatprep.subr.mxu0 0.0
        %1017 = vmatpush1.msra.mxu0 0.0
        %1018 = vmatprep.subr.mxu0 0.0
        %1019 = vmatpush1.msra.mxu0 0.0
        %1020 = vmatprep.subr.mxu0 0.0
        %1021 = vmatpush1.msra.mxu0 0.0
        %1022 = vmatprep.subr.mxu0 0.0
        %1023 = vmatpush1.msra.mxu0 0.0
        %1024 = vmatprep.subr.mxu0 0.0
        %1025 = vmatpush1.msra.mxu0 0.0
        %1026 = vmatprep.subr.mxu0 0.0
        %1027 = vmatpush1.msra.mxu0 0.0
        %1028 = vmatprep.subr.mxu0 0.0
        %1029 = vmatpush1.msra.mxu0 0.0
        %1030 = vmatprep.subr.mxu0 0.0
        %1031 = vmatpush1.msra.mxu0 0.0
        %1032 = vmatprep.subr.mxu0 0.0
        %1033 = vmatpush1.msra.mxu0 0.0
        %1034 = vmatprep.subr.mxu0 0.0
        %1035 = vmatpush1.msra.mxu0 0.0
        %1036 = vmatprep.mubr.f32.mxu0 0.0
        %1037 = vmatmul.mubr.f32.gmra.mrb[0].mxu0 %v946
        %v1038 = vpop.f32.mrb[0].mxu0
        %v1039 = vadd.f32 0.0, %v1038
        %v1040 = vpop.f32.mrb[0].mxu0
        %1041 = vmatprep.mubr.f32.mxu0 0.0
        %1042 = vmatmul.mubr.f32.gmra.mrb[0].mxu0 %v949
        %v1043 = vpop.f32.mrb[0].mxu0
        %v1044 = vadd.f32 0.0, %v1043
        %v1045 = vpop.f32.mrb[0].mxu0
        %1046 = vmatprep.mubr.f32.mxu0 0.0
        %1047 = vmatmul.mubr.f32.gmra.mrb[0].mxu0 %v952
        %v1048 = vpop.f32.mrb[0].mxu0
        %v1049 = vpop.f32.mrb[0].mxu0
        %1050 = vmatprep.mubr.f32.mxu0 0.0
        %1051 = vmatmul.mubr.f32.gmra.mrb[0].mxu0 %v955
        %v1052 = vpop.f32.mrb[0].mxu0
        %v1053 = vadd.f32 0.0, %v1052
        %v1054 = vpop.f32.mrb[0].mxu0
        %1055 = vmatprep.mubr.f32.mxu0 0.0
        %1056 = vmatmul.mubr.f32.gmra.mrb[0].mxu0 %v958
        %v1057 = vpop.f32.mrb[0].mxu0
        %v1058 = vadd.f32 0.0, %v1057
        %v1059 = vpop.f32.mrb[0].mxu0
        %1060 = vmatprep.mubr.f32.mxu0 0.0
        %1061 = vmatmul.mubr.f32.gmra.mrb[0].mxu0 %v961
        %v1062 = vpop.f32.mrb[0].mxu0
        %v1063 = vpop.f32.mrb[0].mxu0
        %1064 = vmatprep.mubr.f32.mxu0 0.0
        %1065 = vmatmul.mubr.f32.gmra.mrb[0].mxu0 %v964
        %v1066 = vpop.f32.mrb[0].mxu0
        %v1067 = vadd.f32 0.0, %v1066
        %v1068 = vpop.f32.mrb[0].mxu0
        %1069 = vmatprep.mubr.f32.mxu0 0.0
        %1070 = vmatmul.mubr.f32.gmra.mrb[0].mxu0 %v967
        %v1071 = vpop.f32.mrb[0].mxu0
        %v1072 = vadd.f32 0.0, %v1071
        %v1073 = vpop.f32.mrb[0].mxu0
        %1074 = vmatprep.mubr.f32.mxu0 0.0
        %1075 = vmatmul.mubr.f32.gmra.mrb[0].mxu0 %v970
        %v1076 = vpop.f32.mrb[0].mxu0
        %v1077 = vpop.f32.mrb[0].mxu0
        %1078 = vdwg.mxu0
        %v1079 = vadd.f32 %v925, %v1039
        %v1080 = vadd.f32 %v926, %v1044
        %v1081 = vadd.f32 %v927, %v1053
        %v1082 = vadd.f32 %v928, %v1058
        %v1083 = vadd.f32 %v929, %v1067
        %v1084 = vadd.f32 %v930, %v1072
        %v1085 = vld [vmem:[#allocation2 + $0x6] sm:$0xff]
        %v1086 = vld [vmem:[#allocation2 + $0xe] sm:$0xff]
        %v1087 = vld [vmem:[#allocation2 + $0x16] sm:$0xff]
        %v1088 = vld [vmem:[#allocation2 + $0x1e] sm:$0xff]
        %v1089 = vld [vmem:[#allocation2 + $0x26] sm:$0xff]
        %v1090 = vld [vmem:[#allocation2 + $0x2e] sm:$0xff]
        %v1091 = vld [vmem:[#allocation2 + $0x36] sm:$0xff]
        %v1092 = vld [vmem:[#allocation2 + $0x3e] sm:$0xff]
        %v1093 = vld [vmem:[#allocation2 + $0x46] sm:$0xff]
        %s1094 = scalar_lea.vmem %s1, 192
        %v1095 = vld [vmem:[%s1094] sm:$0xff]
        %v1096 = vld [vmem:[%s1094 + $0x8] sm:$0xff]
        %v1097 = vld [vmem:[%s1094 + $0x10] sm:$0xff]
        %v1098 = vld [vmem:[%s1094 + $0x18] sm:$0xff]
        %v1100 = vsel %vm148, %v1085, 0
        %v1103 = vsel %vm148, %v1086, 0
        %v1106 = vsel %vm148, %v1087, 0
        %v1109 = vsel %vm148, %v1088, 0
        %v1112 = vsel %vm148, %v1089, 0
        %v1115 = vsel %vm148, %v1090, 0
        %v1118 = vsel %vm148, %v1091, 0
        %v1121 = vsel %vm148, %v1092, 0
        %v1124 = vsel %vm148, %v1093, 0
        %1126 = vmatprep.subr.mxu0 0.0
        %1127 = vmatpush1.msra.mxu0 %v1095
        %1128 = vmatprep.subr.mxu0 0.0
        %1129 = vmatpush1.msra.mxu0 %v1096
        %1130 = vmatprep.subr.mxu0 0.0
        %1131 = vmatpush1.msra.mxu0 %v1097
        %1132 = vmatprep.subr.mxu0 0.0
        %1133 = vmatpush1.msra.mxu0 %v1098
        %1134 = vmatprep.subr.mxu0 0.0
        %1135 = vmatpush1.msra.mxu0 0.0
        %1136 = vmatprep.subr.mxu0 0.0
        %1137 = vmatpush1.msra.mxu0 0.0
        %1138 = vmatprep.subr.mxu0 0.0
        %1139 = vmatpush1.msra.mxu0 0.0
        %1140 = vmatprep.subr.mxu0 0.0
        %1141 = vmatpush1.msra.mxu0 0.0
        %1142 = vmatprep.subr.mxu0 0.0
        %1143 = vmatpush1.msra.mxu0 0.0
        %1144 = vmatprep.subr.mxu0 0.0
        %1145 = vmatpush1.msra.mxu0 0.0
        %1146 = vmatprep.subr.mxu0 0.0
        %1147 = vmatpush1.msra.mxu0 0.0
        %1148 = vmatprep.subr.mxu0 0.0
        %1149 = vmatpush1.msra.mxu0 0.0
        %1150 = vmatprep.subr.mxu0 0.0
        %1151 = vmatpush1.msra.mxu0 0.0
        %1152 = vmatprep.subr.mxu0 0.0
        %1153 = vmatpush1.msra.mxu0 0.0
        %1154 = vmatprep.subr.mxu0 0.0
        %1155 = vmatpush1.msra.mxu0 0.0
        %1156 = vmatprep.subr.mxu0 0.0
        %1157 = vmatpush1.msra.mxu0 0.0
        %1158 = vmatprep.subr.mxu0 0.0
        %1159 = vmatpush1.msra.mxu0 0.0
        %1160 = vmatprep.subr.mxu0 0.0
        %1161 = vmatpush1.msra.mxu0 0.0
        %1162 = vmatprep.subr.mxu0 0.0
        %1163 = vmatpush1.msra.mxu0 0.0
        %1164 = vmatprep.subr.mxu0 0.0
        %1165 = vmatpush1.msra.mxu0 0.0
        %1166 = vmatprep.subr.mxu0 0.0
        %1167 = vmatpush1.msra.mxu0 0.0
        %1168 = vmatprep.subr.mxu0 0.0
        %1169 = vmatpush1.msra.mxu0 0.0
        %1170 = vmatprep.subr.mxu0 0.0
        %1171 = vmatpush1.msra.mxu0 0.0
        %1172 = vmatprep.subr.mxu0 0.0
        %1173 = vmatpush1.msra.mxu0 0.0
        %1174 = vmatprep.subr.mxu0 0.0
        %1175 = vmatpush1.msra.mxu0 0.0
        %1176 = vmatprep.subr.mxu0 0.0
        %1177 = vmatpush1.msra.mxu0 0.0
        %1178 = vmatprep.subr.mxu0 0.0
        %1179 = vmatpush1.msra.mxu0 0.0
        %1180 = vmatprep.subr.mxu0 0.0
        %1181 = vmatpush1.msra.mxu0 0.0
        %1182 = vmatprep.subr.mxu0 0.0
        %1183 = vmatpush1.msra.mxu0 0.0
        %1184 = vmatprep.subr.mxu0 0.0
        %1185 = vmatpush1.msra.mxu0 0.0
        %1186 = vmatprep.subr.mxu0 0.0
        %1187 = vmatpush1.msra.mxu0 0.0
        %1188 = vmatprep.subr.mxu0 0.0
        %1189 = vmatpush1.msra.mxu0 0.0
        %1190 = vmatprep.mubr.f32.mxu0 0.0
        %1191 = vmatmul.mubr.f32.gmra.mrb[0].mxu0 %v1100
        %v1192 = vpop.f32.mrb[0].mxu0
        %v1193 = vadd.f32 0.0, %v1192
        %v1194 = vpop.f32.mrb[0].mxu0
        %1195 = vmatprep.mubr.f32.mxu0 0.0
        %1196 = vmatmul.mubr.f32.gmra.mrb[0].mxu0 %v1103
        %v1197 = vpop.f32.mrb[0].mxu0
        %v1198 = vadd.f32 0.0, %v1197
        %v1199 = vpop.f32.mrb[0].mxu0
        %1200 = vmatprep.mubr.f32.mxu0 0.0
        %1201 = vmatmul.mubr.f32.gmra.mrb[0].mxu0 %v1106
        %v1202 = vpop.f32.mrb[0].mxu0
        %v1203 = vpop.f32.mrb[0].mxu0
        %1204 = vmatprep.mubr.f32.mxu0 0.0
        %1205 = vmatmul.mubr.f32.gmra.mrb[0].mxu0 %v1109
        %v1206 = vpop.f32.mrb[0].mxu0
        %v1207 = vadd.f32 0.0, %v1206
        %v1208 = vpop.f32.mrb[0].mxu0
        %1209 = vmatprep.mubr.f32.mxu0 0.0
        %1210 = vmatmul.mubr.f32.gmra.mrb[0].mxu0 %v1112
        %v1211 = vpop.f32.mrb[0].mxu0
        %v1212 = vadd.f32 0.0, %v1211
        %v1213 = vpop.f32.mrb[0].mxu0
        %1214 = vmatprep.mubr.f32.mxu0 0.0
        %1215 = vmatmul.mubr.f32.gmra.mrb[0].mxu0 %v1115
        %v1216 = vpop.f32.mrb[0].mxu0
        %v1217 = vpop.f32.mrb[0].mxu0
        %1218 = vmatprep.mubr.f32.mxu0 0.0
        %1219 = vmatmul.mubr.f32.gmra.mrb[0].mxu0 %v1118
        %v1220 = vpop.f32.mrb[0].mxu0
        %v1221 = vadd.f32 0.0, %v1220
        %v1222 = vpop.f32.mrb[0].mxu0
        %1223 = vmatprep.mubr.f32.mxu0 0.0
        %1224 = vmatmul.mubr.f32.gmra.mrb[0].mxu0 %v1121
        %v1225 = vpop.f32.mrb[0].mxu0
        %v1226 = vadd.f32 0.0, %v1225
        %v1227 = vpop.f32.mrb[0].mxu0
        %1228 = vmatprep.mubr.f32.mxu0 0.0
        %1229 = vmatmul.mubr.f32.gmra.mrb[0].mxu0 %v1124
        %v1230 = vpop.f32.mrb[0].mxu0
        %v1231 = vpop.f32.mrb[0].mxu0
        %1232 = vdwg.mxu0
        %v1233 = vadd.f32 %v1079, %v1193
        %v1234 = vadd.f32 %v1080, %v1198
        %v1235 = vadd.f32 %v1081, %v1207
        %v1236 = vadd.f32 %v1082, %v1212
        %v1237 = vadd.f32 %v1083, %v1221
        %v1238 = vadd.f32 %v1084, %v1226
        %1239 = vst.msk [vmem:[%s139] sm:$0xff] %vm148, %v1233
        %1240 = vst.msk [vmem:[%s139 + $0x8] sm:$0xff] %vm148, %v1234
        %s1241 = scalar_lea.vmem %s139, 16 [#allocation3]
        %1242 = vst.msk [vmem:[%s1241] sm:$0xff] %vm148, %v1235
        %1243 = vst.msk [vmem:[%s1241 + $0x8] sm:$0xff] %vm148, %v1236
        %s1244 = scalar_lea.vmem %s139, 32 [#allocation3]
        %1245 = vst.msk [vmem:[%s1244] sm:$0xff] %vm148, %v1237
        %1246 = vst.msk [vmem:[%s1244 + $0x8] sm:$0xff] %vm148, %v1238
        %s1247 = sand.u32 %s71, 1
        %s1248 = scalar_lea.sflag [#allocation4], %s1247
        %s1249 = sand.u32 %s71, 1
        %s1250 = smul.addr %s1249, 48
        %s1251 = scalar_lea.vmem [#allocation3], %s1250
        // Predicated region
        $region29: #{vec_conv1d.1} parent=27 // pred_check
          %p1252 = pneg %p81
        $region30: #{vec_conv1d.1} parent=27 // pred_check_branch
          %1254 = sbr.rel (%p1252) target = $region32
        $region31: #{vec_conv1d.1} parent=27 // pred_region
          %s1255 = smul.u32 3, %s16
          %s1257 = ssub.s32 768, 768
          %1258 = vsyncadd %s1248, %s1257
          %s1259 = smul.addr %s1255, 2
          %s1260 = smul.addr %s1259, 128
          %s1261 = scalar_lea.hbm %s2, %s1260
          %s1262 = sshll.u32 %s1251, 4
          %s1263 = int_to_ptr.vmem [resolvable:$true] %s1262
          %1268 = dma.vmem_to_hbm [thread:$0]  %s1263, 768, %s1261, %s1248, 128, 128, 8
        $region32: #{vec_conv1d.1} parent=27 // pred_fallthru
          _
      $region28: #{vec_conv1d.1} parent=5 // pred_fallthru
        _
      %p1269 = scmp.le.s32.totalorder 2, %s11
      // Predicated region
      $region33: #{vec_conv1d.1} parent=5 // pred_check
        %p1270 = pneg %p1269
      $region34: #{vec_conv1d.1} parent=5 // pred_check_branch
        %1272 = sbr.rel (%p1270) target = $region36
      $region35: #{vec_conv1d.1} parent=5 // pred_region
        %s1273 = ssub.s32 %s11, 2
        // Predicated region
        $region37: #{vec_conv1d.1} parent=35 // pred_check
          %p1274 = pneg %p87
        $region38: #{vec_conv1d.1} parent=35 // pred_check_branch
          %1276 = sbr.rel (%p1274) target = $region40
        $region39: #{vec_conv1d.1} parent=35 // pred_region
          %s1277 = sand.u32 %s72, 1
          %s1278 = scalar_lea.sflag [#allocation4], %s1277
          %s1279 = sand.u32 %s72, 1
          %s1280 = smul.addr %s1279, 48
          %s1281 = scalar_lea.vmem [#allocation3], %s1280
          %1282 = dma.done %s1278, 768
        $region40: #{vec_conv1d.1} parent=35 // pred_fallthru
          _
      $region36: #{vec_conv1d.1} parent=5 // pred_fallthru
        _
    $region6: #{vec_conv1d.1} parent=1 // loop_footer
      %s15 = sadd.s32 1, %s11
    $region7: #{vec_conv1d.1} parent=1 // loop_footer_branch
      %10 = sbr.rel target = $region3
    $region8: #{vec_conv1d.1} parent=1 // loop_exit
      _
    %1283 = vsyncpa [#allocation4], 1
    %s1284 = scalar_lea.sflag [#allocation4], 1
    %1285 = vsyncpa %s1284, 1

</llo_original>
